<compile_context>
chip_gen: v7x
topology: tpu7x:2x2x1
jax: 0.10.0
libtpu: 0.0.40
codegen_flags: <defaults>
</compile_context>

<pallas_src>
import jax
import jax.numpy as jnp
from jax.experimental import pallas as pl
from jax.experimental.pallas import tpu as pltpu


def vae_decoder_kernel(x_ref, w1_ref, b1_ref, w2_ref, b2_ref, w3_ref, b3_ref,
                       out_ref):
    # h = LeakyReLU(x @ W1 + b1)
    h = jnp.dot(x_ref[...], w1_ref[...], preferred_element_type=jnp.float32)
    h = h + b1_ref[...]
    h = jnp.maximum(h, 0.2 * h)          # exact LeakyReLU(0.2): mul + max

    # h = LeakyReLU(h @ W2 + b2)
    h = jnp.dot(h, w2_ref[...], preferred_element_type=jnp.float32)
    h = h + b2_ref[...]
    h = jnp.maximum(h, 0.2 * h)

    # x_hat = sigmoid(h @ W3 + b3)
    y = jnp.dot(h, w3_ref[...], preferred_element_type=jnp.float32)
    y = y + b3_ref[...]
    out_ref[...] = jax.nn.sigmoid(y).astype(out_ref.dtype)


def _round_up(v, m):
    return -(-v // m) * m


def _device_kind():
    try:
        return jax.devices()[0].device_kind.lower()
    except Exception:
        return ""


def _plan(batch, latent_dim, hidden_dim, output_dim, x_itemsize, w_itemsize,
          tile_b):
    """Pick (tile_b, dimension_semantics, vmem_limit_bytes) for this device."""
    kind = _device_kind()
    is_v7 = ("v7" in kind) or ("tpu7" in kind)

    if is_v7:
        vmem_limit = 48 << 20            # 64 MiB physical per TC -> headroom
        semantics = (pltpu.CORE_PARALLEL,)   # shard batch across both TCs
    elif ("v6" in kind) or ("v5" in kind):
        vmem_limit = 96 << 20            # 128 MiB physical; raise scoped limit
        semantics = ("parallel",)
    else:
        vmem_limit = None                # unknown chip: keep default scoped VMEM
        semantics = ("parallel",)

    # --- VMEM footprint model (lane-padded!) --------------------------------
    # A (tile_b, d) block occupies tile_b * round_up(d, 128) * itemsize bytes
    # in VMEM regardless of d, so even the "tiny" latent/hidden columns cost a
    # full 128-lane stripe per row.
    lat_l = _round_up(latent_dim, 128)
    hid_l = _round_up(hidden_dim, 128)
    out_l = _round_up(output_dim, 128)

    def _block_bytes(rows, cols, itemsize):
        return _round_up(rows, 8) * _round_up(cols, 128) * itemsize

    # Resident weights/biases (double-buffered allocations by default).
    weight_bytes = 2 * (
        _block_bytes(latent_dim, hidden_dim, w_itemsize)
        + _block_bytes(hidden_dim, hidden_dim, w_itemsize)
        + _block_bytes(hidden_dim, output_dim, w_itemsize)
        + 2 * _block_bytes(1, hidden_dim, 4)
        + _block_bytes(1, output_dim, 4))

    # Per-batch-row bytes: x (2 buffers) + out (2 buffers) + ~2 f32 h temps.
    per_row = 2 * lat_l * x_itemsize + 2 * out_l * 4 + 2 * hid_l * 4
    per_row = int(per_row * 1.5)         # headroom for compiler temporaries

    budget = (vmem_limit if vmem_limit is not None else (16 << 20))
    budget = budget - weight_bytes - (4 << 20)
    tile_b_max = max(8, (budget // per_row) // 8 * 8)

    tile_b = _round_up(max(8, tile_b), 8)
    tile_b = min(tile_b, _round_up(batch, 8), tile_b_max)
    return tile_b, semantics, vmem_limit


def vae_decoder(x, w1, b1, w2, b2, w3, b3, *, tile_b=2048, dot_dtype=None):
    """Fused VAE decoder forward.

    x: (batch, latent_dim); weights are (in, out); biases are (1, out).
    tile_b: batch tile (swept parameter; clamped to the device VMEM budget).
    dot_dtype: if set (e.g. jnp.bfloat16), x and W1 are cast in the wrapper so
      the x HBM read is halved; later layers and all bias / activation /
      sigmoid math stay in f32.
    """
    batch, latent_dim = x.shape
    hidden_dim = w1.shape[1]
    output_dim = w3.shape[1]

    if dot_dtype is not None:
        x = x.astype(dot_dtype)
        w1 = w1.astype(dot_dtype)

    tile_b, semantics, vmem_limit = _plan(
        batch, latent_dim, hidden_dim, output_dim,
        x.dtype.itemsize, w2.dtype.itemsize, tile_b)

    # No wrapper-side padding / slicing: Pallas masks the partial edge block
    # for both the x read and the out write, and the output block's last dim
    # equals the full array dim (legal even when < 128), so out_shape is the
    # exact (batch, output_dim) result.
    grid = (pl.cdiv(batch, tile_b),)

    # Weights/biases stay VMEM-resident across all grid steps (constant block
    # index, so they are DMA'd once).  They are tiny at these shapes; for
    # realistic hidden dims mark them pipeline_mode=pl.Buffered(1) to drop the
    # second buffer.
    resident = lambda a: pl.BlockSpec(a.shape, lambda i: (0, 0))

    cp_kwargs = dict(dimension_semantics=semantics)
    if vmem_limit is not None:
        cp_kwargs["vmem_limit_bytes"] = vmem_limit

    return pl.pallas_call(
        vae_decoder_kernel,
        out_shape=jax.ShapeDtypeStruct((batch, output_dim), jnp.float32),
        grid=grid,
        in_specs=[
            pl.BlockSpec((tile_b, latent_dim), lambda i: (i, 0)),  # batch-tiled x
            resident(w1), resident(b1),
            resident(w2), resident(b2),
            resident(w3), resident(b3),
        ],
        out_specs=pl.BlockSpec((tile_b, output_dim), lambda i: (i, 0)),
        compiler_params=pltpu.CompilerParams(**cp_kwargs),
    )(x, w1, b1, w2, b2, w3, b3)


def init_linear(key, in_dim, out_dim):
    # PyTorch nn.Linear default init: uniform(-1/sqrt(in_dim), 1/sqrt(in_dim))
    kw, kb = jax.random.split(key)
    bound = 1.0 / jnp.sqrt(jnp.float32(in_dim))
    w = jax.random.uniform(kw, (in_dim, out_dim), jnp.float32, -bound, bound)
    b = jax.random.uniform(kb, (1, out_dim), jnp.float32, -bound, bound)
    return w, b


def reference(x, w1, b1, w2, b2, w3, b3):
    h = x @ w1 + b1
    h = jnp.where(h >= 0, h, 0.2 * h)
    h = h @ w2 + b2
    h = jnp.where(h >= 0, h, 0.2 * h)
    return jax.nn.sigmoid(h @ w3 + b3)


if __name__ == "__main__":
    latent_dim, hidden_dim, output_dim = 8, 32, 64
    batch = 2

    key = jax.random.PRNGKey(0)
    kx, k1, k2, k3, kx2 = jax.random.split(key, 5)

    x = jax.random.normal(kx, (batch, latent_dim), jnp.float32)
    w1, b1 = init_linear(k1, latent_dim, hidden_dim)
    w2, b2 = init_linear(k2, hidden_dim, hidden_dim)
    w3, b3 = init_linear(k3, hidden_dim, output_dim)

    ref = reference(x, w1, b1, w2, b2, w3, b3)

    # f32 path: parity with the reference.
    out = jax.block_until_ready(vae_decoder(x, w1, b1, w2, b2, w3, b3))
    assert out.shape == (batch, output_dim)
    assert jnp.allclose(out, ref, atol=1e-5, rtol=1e-5)

    # Partial-edge-tile check: batch not a multiple of tile_b and grid > 1,
    # exercising Pallas' masked read/write on the last block (no wrapper pad).
    batch2 = 300
    x2 = jax.random.normal(kx2, (batch2, latent_dim), jnp.float32)
    ref2 = reference(x2, w1, b1, w2, b2, w3, b3)
    out2 = jax.block_until_ready(
        vae_decoder(x2, w1, b1, w2, b2, w3, b3, tile_b=128))
    assert out2.shape == (batch2, output_dim)
    assert jnp.allclose(out2, ref2, atol=1e-5, rtol=1e-5)

    # bf16 first-layer operands (halved x HBM read); f32 accumulate + epilogue.
    out_bf16 = jax.block_until_ready(
        vae_decoder(x, w1, b1, w2, b2, w3, b3, dot_dtype=jnp.bfloat16))
    assert out_bf16.shape == (batch, output_dim)
    assert jnp.allclose(out_bf16, ref, atol=5e-2, rtol=0)

    print("KERNEL_OK")
</pallas_src>

<mosaic_0001>
module attributes {stable_mosaic.version = 11 : i64} {
  func.func @vae_decoder_kernel(%arg0: i32, %arg1: memref<8x8xf32, #tpu.memory_space<vmem>>, %arg2: memref<8x32xf32, #tpu.memory_space<vmem>>, %arg3: memref<1x32xf32, #tpu.memory_space<vmem>>, %arg4: memref<32x32xf32, #tpu.memory_space<vmem>>, %arg5: memref<1x32xf32, #tpu.memory_space<vmem>>, %arg6: memref<32x64xf32, #tpu.memory_space<vmem>>, %arg7: memref<1x64xf32, #tpu.memory_space<vmem>>, %arg8: memref<8x64xf32, #tpu.memory_space<vmem>>) attributes {dimension_semantics = [#tpu.dimension_semantics<parallel>], iteration_bounds = array<i64: 1>, scalar_prefetch = 0 : i64, scratch_operands = 0 : i64, tpu.core_type = #tpu.core_type<tc>, window_params = [{transform_indices = @transform_0, window_bounds = array<i64: 8, 8>}, {pipeline_mode = #tpu.pipeline_mode<synchronous>, transform_indices = @transform_1, window_bounds = array<i64: 8, 32>}, {pipeline_mode = #tpu.pipeline_mode<synchronous>, transform_indices = @transform_2, window_bounds = array<i64: 1, 32>}, {pipeline_mode = #tpu.pipeline_mode<synchronous>, transform_indices = @transform_3, window_bounds = array<i64: 32, 32>}, {pipeline_mode = #tpu.pipeline_mode<synchronous>, transform_indices = @transform_4, window_bounds = array<i64: 1, 32>}, {pipeline_mode = #tpu.pipeline_mode<synchronous>, transform_indices = @transform_5, window_bounds = array<i64: 32, 64>}, {pipeline_mode = #tpu.pipeline_mode<synchronous>, transform_indices = @transform_6, window_bounds = array<i64: 1, 64>}, {transform_indices = @transform_7, window_bounds = array<i64: 8, 64>}]} {
    %c0 = arith.constant 0 : index
    %c0_0 = arith.constant 0 : index
    %0 = vector.load %arg1[%c0, %c0_0] : memref<8x8xf32, #tpu.memory_space<vmem>>, vector<8x8xf32>
    %c0_1 = arith.constant 0 : index
    %c0_2 = arith.constant 0 : index
    %1 = vector.load %arg2[%c0_1, %c0_2] : memref<8x32xf32, #tpu.memory_space<vmem>>, vector<8x32xf32>
    %cst = arith.constant dense<0.000000e+00> : vector<8x32xf32>
    %2 = tpu.matmul %0, %1, %cst {dimension_numbers = #tpu.dot_dimension_numbers<[1], [0], [0], [1], [0, 0, 1, 1], [], []>} : vector<8x8xf32>, vector<8x32xf32>, vector<8x32xf32> -> vector<8x32xf32>
    %c0_3 = arith.constant 0 : index
    %c0_4 = arith.constant 0 : index
    %3 = vector.load %arg3[%c0_3, %c0_4] : memref<1x32xf32, #tpu.memory_space<vmem>>, vector<1x32xf32>
    %4 = vector.broadcast %3 : vector<1x32xf32> to vector<8x32xf32>
    %5 = arith.addf %2, %4 : vector<8x32xf32>
    %cst_5 = arith.constant 2.000000e-01 : f32
    %6 = vector.broadcast %cst_5 : f32 to vector<8x32xf32>
    %7 = arith.mulf %6, %5 : vector<8x32xf32>
    %8 = arith.maximumf %5, %7 : vector<8x32xf32>
    %c0_6 = arith.constant 0 : index
    %c0_7 = arith.constant 0 : index
    %9 = vector.load %arg4[%c0_6, %c0_7] : memref<32x32xf32, #tpu.memory_space<vmem>>, vector<32x32xf32>
    %cst_8 = arith.constant dense<0.000000e+00> : vector<8x32xf32>
    %10 = tpu.matmul %8, %9, %cst_8 {dimension_numbers = #tpu.dot_dimension_numbers<[1], [0], [0], [1], [0, 0, 1, 1], [], []>} : vector<8x32xf32>, vector<32x32xf32>, vector<8x32xf32> -> vector<8x32xf32>
    %c0_9 = arith.constant 0 : index
    %c0_10 = arith.constant 0 : index
    %11 = vector.load %arg5[%c0_9, %c0_10] : memref<1x32xf32, #tpu.memory_space<vmem>>, vector<1x32xf32>
    %12 = vector.broadcast %11 : vector<1x32xf32> to vector<8x32xf32>
    %13 = arith.addf %10, %12 : vector<8x32xf32>
    %cst_11 = arith.constant 2.000000e-01 : f32
    %14 = vector.broadcast %cst_11 : f32 to vector<8x32xf32>
    %15 = arith.mulf %14, %13 : vector<8x32xf32>
    %16 = arith.maximumf %13, %15 : vector<8x32xf32>
    %c0_12 = arith.constant 0 : index
    %c0_13 = arith.constant 0 : index
    %17 = vector.load %arg6[%c0_12, %c0_13] : memref<32x64xf32, #tpu.memory_space<vmem>>, vector<32x64xf32>
    %cst_14 = arith.constant dense<0.000000e+00> : vector<8x64xf32>
    %18 = tpu.matmul %16, %17, %cst_14 {dimension_numbers = #tpu.dot_dimension_numbers<[1], [0], [0], [1], [0, 0, 1, 1], [], []>} : vector<8x32xf32>, vector<32x64xf32>, vector<8x64xf32> -> vector<8x64xf32>
    %c0_15 = arith.constant 0 : index
    %c0_16 = arith.constant 0 : index
    %19 = vector.load %arg7[%c0_15, %c0_16] : memref<1x64xf32, #tpu.memory_space<vmem>>, vector<1x64xf32>
    %20 = vector.broadcast %19 : vector<1x64xf32> to vector<8x64xf32>
    %21 = arith.addf %18, %20 : vector<8x64xf32>
    %22 = arith.negf %21 : vector<8x64xf32>
    %23 = math.exp %22 : vector<8x64xf32>
    %cst_17 = arith.constant 1.000000e+00 : f32
    %24 = vector.broadcast %cst_17 : f32 to vector<8x64xf32>
    %25 = arith.addf %24, %23 : vector<8x64xf32>
    %26 = arith.divf %24, %25 : vector<8x64xf32>
    %c0_18 = arith.constant 0 : index
    %c0_19 = arith.constant 0 : index
    %27 = vector.load %arg8[%c0_18, %c0_19] : memref<8x64xf32, #tpu.memory_space<vmem>>, vector<8x64xf32>
    tpu.vector_store %arg8[%c0_18, %c0_19], %26 {strides = array<i32>} : memref<8x64xf32, #tpu.memory_space<vmem>>, vector<8x64xf32>,
    return
  }
  func.func @transform_0(%arg0: i32) -> (i32, i32) {
    %c0_i32 = arith.constant 0 : i32
    %c0_i32_0 = arith.constant 0 : i32
    return %arg0, %c0_i32 : i32, i32
  }
  func.func @transform_1(%arg0: i32) -> (i32, i32) {
    %c0_i32 = arith.constant 0 : i32
    %c0_i32_0 = arith.constant 0 : i32
    %c0_i32_1 = arith.constant 0 : i32
    return %c0_i32, %c0_i32_0 : i32, i32
  }
  func.func @transform_2(%arg0: i32) -> (i32, i32) {
    %c0_i32 = arith.constant 0 : i32
    %c0_i32_0 = arith.constant 0 : i32
    %c0_i32_1 = arith.constant 0 : i32
    return %c0_i32, %c0_i32_0 : i32, i32
  }
  func.func @transform_3(%arg0: i32) -> (i32, i32) {
    %c0_i32 = arith.constant 0 : i32
    %c0_i32_0 = arith.constant 0 : i32
    %c0_i32_1 = arith.constant 0 : i32
    return %c0_i32, %c0_i32_0 : i32, i32
  }
  func.func @transform_4(%arg0: i32) -> (i32, i32) {
    %c0_i32 = arith.constant 0 : i32
    %c0_i32_0 = arith.constant 0 : i32
    %c0_i32_1 = arith.constant 0 : i32
    return %c0_i32, %c0_i32_0 : i32, i32
  }
  func.func @transform_5(%arg0: i32) -> (i32, i32) {
    %c0_i32 = arith.constant 0 : i32
    %c0_i32_0 = arith.constant 0 : i32
    %c0_i32_1 = arith.constant 0 : i32
    return %c0_i32, %c0_i32_0 : i32, i32
  }
  func.func @transform_6(%arg0: i32) -> (i32, i32) {
    %c0_i32 = arith.constant 0 : i32
    %c0_i32_0 = arith.constant 0 : i32
    %c0_i32_1 = arith.constant 0 : i32
    return %c0_i32, %c0_i32_0 : i32, i32
  }
  func.func @transform_7(%arg0: i32) -> (i32, i32) {
    %c0_i32 = arith.constant 0 : i32
    %c0_i32_0 = arith.constant 0 : i32
    return %arg0, %c0_i32 : i32, i32
  }
}

</mosaic_0001>

<llo_original>
// kernel: tpu_custom_call.1
$region0: #{tpu_custom_call.1}
  #allocation0 [shape = 'u32[]', space=smem, size = 0x4, offset = 0x4, fixed_abs, tag = 'smem constant byte address 0x4 - core index']
  #allocation1 [shape = 'u32[144,128]{1,0:T(1,128)}', space=vmem, size = 0x12000, scoped, tag = 'internal scratch']
  %s0 = inlined_call_operand.hbm [shape: f32[2,8], index: 0, kind: input, shape index: {}]
  %s1 = inlined_call_operand.hbm [shape: f32[8,32], index: 1, kind: input, shape index: {}]
  %s2 = inlined_call_operand.vmem [shape: f32[1,32], index: 2, kind: input, shape index: {}]
  %s3 = inlined_call_operand.hbm [shape: f32[32,32], index: 3, kind: input, shape index: {}]
  %s4 = inlined_call_operand.vmem [shape: f32[1,32], index: 4, kind: input, shape index: {}]
  %s5 = inlined_call_operand.hbm [shape: f32[32,64], index: 5, kind: input, shape index: {}]
  %s6 = inlined_call_operand.vmem [shape: f32[1,64], index: 6, kind: input, shape index: {}]
  %s7 = inlined_call_operand.hbm [shape: f32[2,64], index: 7, kind: output, shape index: {}]
  %s8 = sld [smem:[#allocation0]]
  $region54: #{tpu_custom_call.1} parent=0
    _
  %s10 = ssub.s32 1, %s8
  %s11 = scalar_select 0, %s10, %s8
  $region1: #{tpu_custom_call.1} parent=0
    #allocation2 [shape = 'u8[4096]{0}', space=vmem, size = 0x1000, scoped, tag = 'input window, operand 0, single buffered']
    #allocation3 [shape = 's32[1]{0}', space=sflag, size = 0x4, scoped, tag = 'scoped memory for tpu_custom_call.1']
    #allocation4 [shape = 's32[1]{0}', space=sflag, size = 0x4, scoped, tag = 'scoped memory for tpu_custom_call.1']
    #allocation5 [shape = 'u8[4096]{0}', space=vmem, size = 0x1000, scoped, tag = 'input window, operand 1, single buffered']
    #allocation6 [shape = 's32[1]{0}', space=sflag, size = 0x4, scoped, tag = 'scoped memory for tpu_custom_call.1']
    #allocation7 [shape = 'u8[16384]{0}', space=vmem, size = 0x4000, scoped, tag = 'input window, operand 3, single buffered']
    #allocation8 [shape = 'u8[16384]{0}', space=vmem, size = 0x4000, scoped, tag = 'input window, operand 5, single buffered']
    #allocation9 [shape = 's32[1]{0}', space=sflag, size = 0x4, scoped, tag = 'scoped memory for tpu_custom_call.1']
    #allocation10 [shape = 'u8[4096]{0}', space=vmem, size = 0x1000, scoped, tag = 'output window, operand 0, single buffered']
    %12 = vsyncpa [#allocation3], 0
    %13 = vsyncpa [#allocation6], 0
    %14 = vsyncpa [#allocation9], 0
    %15 = vsyncpa [#allocation4], 0
    // Predicated region
    $region2: #{tpu_custom_call.1} parent=1 // pred_check
      _
    $region3: #{tpu_custom_call.1} parent=1 // pred_check_branch
      %17 = sbr.rel (0) target = $region5
    $region4: #{tpu_custom_call.1} parent=1 // pred_region
      %s19 = ssub.s32 128, 32
      %20 = vsyncadd [#allocation3], %s19
      %s21 = sshll.u32 [#allocation2], 4
      %s22 = int_to_ptr.vmem [resolvable:$true] %s21
      %27 = dma.hbm_to_vmem [thread:$0]  %s0, 32, %s22, [#allocation3], 32, 32, 2
    $region5: #{tpu_custom_call.1} parent=1 // pred_fallthru
      _
    // Predicated region
    $region6: #{tpu_custom_call.1} parent=1 // pred_check
      _
    $region7: #{tpu_custom_call.1} parent=1 // pred_check_branch
      %29 = sbr.rel (0) target = $region9
    $region8: #{tpu_custom_call.1} parent=1 // pred_region
      %s31 = ssub.s32 128, 128
      %32 = vsyncadd [#allocation6], %s31
      %s34 = sshll.u32 [#allocation5], 4
      %s35 = int_to_ptr.vmem [resolvable:$true] %s34
      %37 = dma.hbm_to_vmem [thread:$0]  %s1, 128, %s35, [#allocation6]
    $region9: #{tpu_custom_call.1} parent=1 // pred_fallthru
      _
    // Predicated region
    $region10: #{tpu_custom_call.1} parent=1 // pred_check
      _
    $region11: #{tpu_custom_call.1} parent=1 // pred_check_branch
      %39 = sbr.rel (0) target = $region13
    $region12: #{tpu_custom_call.1} parent=1 // pred_region
      _
    $region13: #{tpu_custom_call.1} parent=1 // pred_fallthru
      _
    // Predicated region
    $region14: #{tpu_custom_call.1} parent=1 // pred_check
      _
    $region15: #{tpu_custom_call.1} parent=1 // pred_check_branch
      %41 = sbr.rel (0) target = $region17
    $region16: #{tpu_custom_call.1} parent=1 // pred_region
      %s43 = ssub.s32 512, 512
      %44 = vsyncadd [#allocation6], %s43
      %s45 = sshll.u32 [#allocation7], 4
      %s46 = int_to_ptr.vmem [resolvable:$true] %s45
      %51 = dma.hbm_to_vmem [thread:$0]  %s3, 512, %s46, [#allocation6], 128, 128, 8
    $region17: #{tpu_custom_call.1} parent=1 // pred_fallthru
      _
    // Predicated region
    $region18: #{tpu_custom_call.1} parent=1 // pred_check
      _
    $region19: #{tpu_custom_call.1} parent=1 // pred_check_branch
      %53 = sbr.rel (0) target = $region21
    $region20: #{tpu_custom_call.1} parent=1 // pred_region
      _
    $region21: #{tpu_custom_call.1} parent=1 // pred_fallthru
      _
    // Predicated region
    $region22: #{tpu_custom_call.1} parent=1 // pred_check
      _
    $region23: #{tpu_custom_call.1} parent=1 // pred_check_branch
      %55 = sbr.rel (0) target = $region25
    $region24: #{tpu_custom_call.1} parent=1 // pred_region
      %s57 = ssub.s32 512, 512
      %58 = vsyncadd [#allocation9], %s57
      %s59 = sshll.u32 [#allocation8], 4
      %s60 = int_to_ptr.vmem [resolvable:$true] %s59
      %65 = dma.hbm_to_vmem [thread:$0]  %s5, 512, %s60, [#allocation9], 128, 128, 8
    $region25: #{tpu_custom_call.1} parent=1 // pred_fallthru
      _
    // Predicated region
    $region26: #{tpu_custom_call.1} parent=1 // pred_check
      _
    $region27: #{tpu_custom_call.1} parent=1 // pred_check_branch
      %67 = sbr.rel (0) target = $region29
    $region28: #{tpu_custom_call.1} parent=1 // pred_region
      _
    $region29: #{tpu_custom_call.1} parent=1 // pred_fallthru
      _
    // Predicated region
    $region30: #{tpu_custom_call.1} parent=1 // pred_check
      _
    $region31: #{tpu_custom_call.1} parent=1 // pred_check_branch
      %69 = sbr.rel (0) target = $region33
    $region32: #{tpu_custom_call.1} parent=1 // pred_region
      %70 = dma.done [#allocation3], 128
    $region33: #{tpu_custom_call.1} parent=1 // pred_fallthru
      _
    // Predicated region
    $region34: #{tpu_custom_call.1} parent=1 // pred_check
      _
    $region35: #{tpu_custom_call.1} parent=1 // pred_check_branch
      %72 = sbr.rel (0) target = $region37
    $region36: #{tpu_custom_call.1} parent=1 // pred_region
      %73 = dma.done [#allocation6], 128
    $region37: #{tpu_custom_call.1} parent=1 // pred_fallthru
      _
    // Predicated region
    $region38: #{tpu_custom_call.1} parent=1 // pred_check
      _
    $region39: #{tpu_custom_call.1} parent=1 // pred_check_branch
      %75 = sbr.rel (0) target = $region41
    $region40: #{tpu_custom_call.1} parent=1 // pred_region
      %76 = dma.done [#allocation6], 512
    $region41: #{tpu_custom_call.1} parent=1 // pred_fallthru
      _
    // Predicated region
    $region42: #{tpu_custom_call.1} parent=1 // pred_check
      _
    $region43: #{tpu_custom_call.1} parent=1 // pred_check_branch
      %78 = sbr.rel (0) target = $region45
    $region44: #{tpu_custom_call.1} parent=1 // pred_region
      %79 = dma.done [#allocation9], 512
    $region45: #{tpu_custom_call.1} parent=1 // pred_fallthru
      _
    %v80 = vld [vmem:[#allocation2] sm:$0xff]
    %v81 = vld [vmem:[#allocation5] sm:$0xff]
    %v82 = vld [vmem:[%s2] sm:$0x1]
    %v84 = vlaneseq
    %v85 = vshrl.u32 %v84, 7
    %v86 = vsub.s32 0, %v85
    %v87 = vrot.slane %v82, %v86
    %vm89 = vcmask 64512
    %v91 = vsel %vm89, %v80, 0
    %93 = vmatprep.subr.mxu0 0.0
    %94 = vmatpush1.msra.mxu0 %v81
    %95 = vmatprep.subr.mxu0 0.0
    %96 = vmatpush1.msra.mxu0 0.0
    %97 = vmatprep.subr.mxu0 0.0
    %98 = vmatpush1.msra.mxu0 0.0
    %99 = vmatprep.subr.mxu0 0.0
    %100 = vmatpush1.msra.mxu0 0.0
    %101 = vmatprep.subr.mxu0 0.0
    %102 = vmatpush1.msra.mxu0 0.0
    %103 = vmatprep.subr.mxu0 0.0
    %104 = vmatpush1.msra.mxu0 0.0
    %105 = vmatprep.subr.mxu0 0.0
    %106 = vmatpush1.msra.mxu0 0.0
    %107 = vmatprep.subr.mxu0 0.0
    %108 = vmatpush1.msra.mxu0 0.0
    %109 = vmatprep.subr.mxu0 0.0
    %110 = vmatpush1.msra.mxu0 0.0
    %111 = vmatprep.subr.mxu0 0.0
    %112 = vmatpush1.msra.mxu0 0.0
    %113 = vmatprep.subr.mxu0 0.0
    %114 = vmatpush1.msra.mxu0 0.0
    %115 = vmatprep.subr.mxu0 0.0
    %116 = vmatpush1.msra.mxu0 0.0
    %117 = vmatprep.subr.mxu0 0.0
    %118 = vmatpush1.msra.mxu0 0.0
    %119 = vmatprep.subr.mxu0 0.0
    %120 = vmatpush1.msra.mxu0 0.0
    %121 = vmatprep.subr.mxu0 0.0
    %122 = vmatpush1.msra.mxu0 0.0
    %123 = vmatprep.subr.mxu0 0.0
    %124 = vmatpush1.msra.mxu0 0.0
    %125 = vmatprep.subr.mxu0 0.0
    %126 = vmatpush1.msra.mxu0 0.0
    %127 = vmatprep.subr.mxu0 0.0
    %128 = vmatpush1.msra.mxu0 0.0
    %129 = vmatprep.subr.mxu0 0.0
    %130 = vmatpush1.msra.mxu0 0.0
    %131 = vmatprep.subr.mxu0 0.0
    %132 = vmatpush1.msra.mxu0 0.0
    %133 = vmatprep.subr.mxu0 0.0
    %134 = vmatpush1.msra.mxu0 0.0
    %135 = vmatprep.subr.mxu0 0.0
    %136 = vmatpush1.msra.mxu0 0.0
    %137 = vmatprep.subr.mxu0 0.0
    %138 = vmatpush1.msra.mxu0 0.0
    %139 = vmatprep.subr.mxu0 0.0
    %140 = vmatpush1.msra.mxu0 0.0
    %141 = vmatprep.subr.mxu0 0.0
    %142 = vmatpush1.msra.mxu0 0.0
    %143 = vmatprep.subr.mxu0 0.0
    %144 = vmatpush1.msra.mxu0 0.0
    %145 = vmatprep.subr.mxu0 0.0
    %146 = vmatpush1.msra.mxu0 0.0
    %147 = vmatprep.subr.mxu0 0.0
    %148 = vmatpush1.msra.mxu0 0.0
    %149 = vmatprep.subr.mxu0 0.0
    %150 = vmatpush1.msra.mxu0 0.0
    %151 = vmatprep.subr.mxu0 0.0
    %152 = vmatpush1.msra.mxu0 0.0
    %153 = vmatprep.subr.mxu0 0.0
    %154 = vmatpush1.msra.mxu0 0.0
    %155 = vmatprep.subr.mxu0 0.0
    %156 = vmatpush1.msra.mxu0 0.0
    %157 = vmatprep.mubr.f32.mxu0 0.0
    %158 = vmatmul.mubr.f32.gmra.mrb[0].mxu0 %v91
    %v159 = vpop.f32.mrb[0].mxu0
    %v160 = vadd.f32 %v87, %v159
    %v161 = vpop.f32.mrb[0].mxu0
    %162 = vdwg.mxu0
    %v163 = vmul.f32 %v160, 0.2
    %v164 = vmax.f32 %v160, %v163
    %v165 = vld [vmem:[#allocation7] sm:$0xff]
    %v166 = vld [vmem:[#allocation7 + $0x8] sm:$0xff]
    %v167 = vld [vmem:[#allocation7 + $0x10] sm:$0xff]
    %v168 = vld [vmem:[#allocation7 + $0x18] sm:$0xff]
    %v169 = vld [vmem:[%s4] sm:$0x1]
    %v171 = vlaneseq
    %v172 = vshrl.u32 %v171, 7
    %v173 = vsub.s32 0, %v172
    %v174 = vrot.slane %v169, %v173
    %vm176 = vcmask 261120
    %v178 = vsel %vm176, %v164, 0
    %180 = vmatprep.subr.mxu0 0.0
    %181 = vmatpush1.msra.mxu0 %v165
    %182 = vmatprep.subr.mxu0 0.0
    %183 = vmatpush1.msra.mxu0 %v166
    %184 = vmatprep.subr.mxu0 0.0
    %185 = vmatpush1.msra.mxu0 %v167
    %186 = vmatprep.subr.mxu0 0.0
    %187 = vmatpush1.msra.mxu0 %v168
    %188 = vmatprep.subr.mxu0 0.0
    %189 = vmatpush1.msra.mxu0 0.0
    %190 = vmatprep.subr.mxu0 0.0
    %191 = vmatpush1.msra.mxu0 0.0
    %192 = vmatprep.subr.mxu0 0.0
    %193 = vmatpush1.msra.mxu0 0.0
    %194 = vmatprep.subr.mxu0 0.0
    %195 = vmatpush1.msra.mxu0 0.0
    %196 = vmatprep.subr.mxu0 0.0
    %197 = vmatpush1.msra.mxu0 0.0
    %198 = vmatprep.subr.mxu0 0.0
    %199 = vmatpush1.msra.mxu0 0.0
    %200 = vmatprep.subr.mxu0 0.0
    %201 = vmatpush1.msra.mxu0 0.0
    %202 = vmatprep.subr.mxu0 0.0
    %203 = vmatpush1.msra.mxu0 0.0
    %204 = vmatprep.subr.mxu0 0.0
    %205 = vmatpush1.msra.mxu0 0.0
    %206 = vmatprep.subr.mxu0 0.0
    %207 = vmatpush1.msra.mxu0 0.0
    %208 = vmatprep.subr.mxu0 0.0
    %209 = vmatpush1.msra.mxu0 0.0
    %210 = vmatprep.subr.mxu0 0.0
    %211 = vmatpush1.msra.mxu0 0.0
    %212 = vmatprep.subr.mxu0 0.0
    %213 = vmatpush1.msra.mxu0 0.0
    %214 = vmatprep.subr.mxu0 0.0
    %215 = vmatpush1.msra.mxu0 0.0
    %216 = vmatprep.subr.mxu0 0.0
    %217 = vmatpush1.msra.mxu0 0.0
    %218 = vmatprep.subr.mxu0 0.0
    %219 = vmatpush1.msra.mxu0 0.0
    %220 = vmatprep.subr.mxu0 0.0
    %221 = vmatpush1.msra.mxu0 0.0
    %222 = vmatprep.subr.mxu0 0.0
    %223 = vmatpush1.msra.mxu0 0.0
    %224 = vmatprep.subr.mxu0 0.0
    %225 = vmatpush1.msra.mxu0 0.0
    %226 = vmatprep.subr.mxu0 0.0
    %227 = vmatpush1.msra.mxu0 0.0
    %228 = vmatprep.subr.mxu0 0.0
    %229 = vmatpush1.msra.mxu0 0.0
    %230 = vmatprep.subr.mxu0 0.0
    %231 = vmatpush1.msra.mxu0 0.0
    %232 = vmatprep.subr.mxu0 0.0
    %233 = vmatpush1.msra.mxu0 0.0
    %234 = vmatprep.subr.mxu0 0.0
    %235 = vmatpush1.msra.mxu0 0.0
    %236 = vmatprep.subr.mxu0 0.0
    %237 = vmatpush1.msra.mxu0 0.0
    %238 = vmatprep.subr.mxu0 0.0
    %239 = vmatpush1.msra.mxu0 0.0
    %240 = vmatprep.subr.mxu0 0.0
    %241 = vmatpush1.msra.mxu0 0.0
    %242 = vmatprep.subr.mxu0 0.0
    %243 = vmatpush1.msra.mxu0 0.0
    %244 = vmatprep.mubr.f32.mxu0 0.0
    %245 = vmatmul.mubr.f32.gmra.mrb[0].mxu0 %v178
    %v246 = vpop.f32.mrb[0].mxu0
    %v247 = vadd.f32 %v174, %v246
    %v248 = vpop.f32.mrb[0].mxu0
    %249 = vdwg.mxu0
    %v250 = vmul.f32 %v247, 0.2
    %v251 = vmax.f32 %v247, %v250
    %v252 = vld [vmem:[#allocation8] sm:$0xff]
    %v253 = vld [vmem:[#allocation8 + $0x8] sm:$0xff]
    %v254 = vld [vmem:[#allocation8 + $0x10] sm:$0xff]
    %v255 = vld [vmem:[#allocation8 + $0x18] sm:$0xff]
    %v256 = vld [vmem:[%s6] sm:$0x1]
    %v258 = vlaneseq
    %v259 = vshrl.u32 %v258, 7
    %v260 = vsub.s32 0, %v259
    %v261 = vrot.slane %v256, %v260
    %v264 = vsel %vm176, %v251, 0
    %266 = vmatprep.subr.mxu0 0.0
    %267 = vmatpush1.msra.mxu0 %v252
    %268 = vmatprep.subr.mxu0 0.0
    %269 = vmatpush1.msra.mxu0 %v253
    %270 = vmatprep.subr.mxu0 0.0
    %271 = vmatpush1.msra.mxu0 %v254
    %272 = vmatprep.subr.mxu0 0.0
    %273 = vmatpush1.msra.mxu0 %v255
    %274 = vmatprep.subr.mxu0 0.0
    %275 = vmatpush1.msra.mxu0 0.0
    %276 = vmatprep.subr.mxu0 0.0
    %277 = vmatpush1.msra.mxu0 0.0
    %278 = vmatprep.subr.mxu0 0.0
    %279 = vmatpush1.msra.mxu0 0.0
    %280 = vmatprep.subr.mxu0 0.0
    %281 = vmatpush1.msra.mxu0 0.0
    %282 = vmatprep.subr.mxu0 0.0
    %283 = vmatpush1.msra.mxu0 0.0
    %284 = vmatprep.subr.mxu0 0.0
    %285 = vmatpush1.msra.mxu0 0.0
    %286 = vmatprep.subr.mxu0 0.0
    %287 = vmatpush1.msra.mxu0 0.0
    %288 = vmatprep.subr.mxu0 0.0
    %289 = vmatpush1.msra.mxu0 0.0
    %290 = vmatprep.subr.mxu0 0.0
    %291 = vmatpush1.msra.mxu0 0.0
    %292 = vmatprep.subr.mxu0 0.0
    %293 = vmatpush1.msra.mxu0 0.0
    %294 = vmatprep.subr.mxu0 0.0
    %295 = vmatpush1.msra.mxu0 0.0
    %296 = vmatprep.subr.mxu0 0.0
    %297 = vmatpush1.msra.mxu0 0.0
    %298 = vmatprep.subr.mxu0 0.0
    %299 = vmatpush1.msra.mxu0 0.0
    %300 = vmatprep.subr.mxu0 0.0
    %301 = vmatpush1.msra.mxu0 0.0
    %302 = vmatprep.subr.mxu0 0.0
    %303 = vmatpush1.msra.mxu0 0.0
    %304 = vmatprep.subr.mxu0 0.0
    %305 = vmatpush1.msra.mxu0 0.0
    %306 = vmatprep.subr.mxu0 0.0
    %307 = vmatpush1.msra.mxu0 0.0
    %308 = vmatprep.subr.mxu0 0.0
    %309 = vmatpush1.msra.mxu0 0.0
    %310 = vmatprep.subr.mxu0 0.0
    %311 = vmatpush1.msra.mxu0 0.0
    %312 = vmatprep.subr.mxu0 0.0
    %313 = vmatpush1.msra.mxu0 0.0
    %314 = vmatprep.subr.mxu0 0.0
    %315 = vmatpush1.msra.mxu0 0.0
    %316 = vmatprep.subr.mxu0 0.0
    %317 = vmatpush1.msra.mxu0 0.0
    %318 = vmatprep.subr.mxu0 0.0
    %319 = vmatpush1.msra.mxu0 0.0
    %320 = vmatprep.subr.mxu0 0.0
    %321 = vmatpush1.msra.mxu0 0.0
    %322 = vmatprep.subr.mxu0 0.0
    %323 = vmatpush1.msra.mxu0 0.0
    %324 = vmatprep.subr.mxu0 0.0
    %325 = vmatpush1.msra.mxu0 0.0
    %326 = vmatprep.subr.mxu0 0.0
    %327 = vmatpush1.msra.mxu0 0.0
    %328 = vmatprep.subr.mxu0 0.0
    %329 = vmatpush1.msra.mxu0 0.0
    %330 = vmatprep.mubr.f32.mxu0 0.0
    %331 = vmatmul.mubr.f32.gmra.mrb[0].mxu0 %v264
    %v332 = vpop.f32.mrb[0].mxu0
    %v333 = vadd.f32 %v261, %v332
    %v334 = vpop.f32.mrb[0].mxu0
    %335 = vdwg.mxu0
    %v336 = vxor.u32 %v333, 2147483648
    %v337 = vmul.f32 %v336, 1.442695
    %v338 = vpow.pop %v337
    %v339 = vadd.f32 %v338, 1.0
    %v340 = vrcp.pop %v339
    %v341 = vmul.f32 1.0, %v340
    %vm342 = vcmask 523264
    %343 = vst.msk [vmem:[#allocation10] sm:$0xff] %vm342, %v341
    // Predicated region
    $region46: #{tpu_custom_call.1} parent=1 // pred_check
      _
    $region47: #{tpu_custom_call.1} parent=1 // pred_check_branch
      %345 = sbr.rel (0) target = $region49
    $region48: #{tpu_custom_call.1} parent=1 // pred_region
      %s347 = ssub.s32 128, 32
      %348 = vsyncadd [#allocation4], %s347
      %s349 = sshll.u32 [#allocation10], 4
      %s350 = int_to_ptr.vmem [resolvable:$true] %s349
      %355 = dma.vmem_to_hbm [thread:$0]  %s350, 32, %s7, [#allocation4], 32, 32, 2
    $region49: #{tpu_custom_call.1} parent=1 // pred_fallthru
      _
    // Predicated region
    $region50: #{tpu_custom_call.1} parent=1 // pred_check
      _
    $region51: #{tpu_custom_call.1} parent=1 // pred_check_branch
      %357 = sbr.rel (0) target = $region53
    $region52: #{tpu_custom_call.1} parent=1 // pred_region
      %358 = dma.done [#allocation4], 128
    $region53: #{tpu_custom_call.1} parent=1 // pred_fallthru
      _
    %359 = vsyncpa [#allocation3], 1
    %360 = vsyncpa [#allocation6], 1
    %361 = vsyncpa [#allocation9], 1
    %362 = vsyncpa [#allocation4], 1

</llo_original>
